<compile_context>
chip_gen: v7x
topology: tpu7x:2x2x1
jax: 0.10.0
libtpu: 0.0.40
codegen_flags: <defaults>
</compile_context>

<pallas_src>
import functools

import jax
import jax.numpy as jnp
from jax.experimental import pallas as pl
from jax.experimental.pallas import tpu as pltpu

EPS = 1e-5          # torch.nn.InstanceNorm2d default eps
NEG_SLOPE = 0.2     # LeakyReLU slope
# dropout=0.0 in the reference module -> no dropout layer is added.


def _unet_down_kernel(xs_ref, w_ref, out_ref, tap_ref, *, oh, ow, eps, neg_slope):
    """One (batch, C_out-tile) grid step.

    xs_ref : (2, OH+1, OW, K4)   dw-pre-split space-to-depth input (compute dtype)
    w_ref  : (TC, 4*K4)          conv weight, taps flattened into the contraction dim
    out_ref: (TC, OH*OW)         NCHW output block
    tap_ref: (OH*OW, 4*K4)       VMEM scratch -- fused-matmul RHS
    """
    p = oh * ow
    k4 = xs_ref.shape[-1]

    # Pack the 4 taps into aligned 128-lane slices of the scratch.  The slice below only
    # touches the two outermost dims of the block (a view) and the reshape merges
    # contiguous dims, so the only data movement is the single store into tap_ref.
    for dh in (0, 1):
        for dw in (0, 1):
            t = 2 * dh + dw
            tap = xs_ref[dw, dh:dh + oh]                        # (OH, OW, K4) view
            tap_ref[:, t * k4:(t + 1) * k4] = tap.reshape(p, k4)

    # Single MXU matmul: (TC, 4*K4) x (P, 4*K4)^T -> (TC, P), f32 accumulation.
    acc = jax.lax.dot_general(
        w_ref[...], tap_ref[...],
        dimension_numbers=(((1,), (1,)), ((), ())),
        preferred_element_type=jnp.float32)

    # InstanceNorm2d (affine=False) + LeakyReLU, fused one-pass epilogue in f32.
    inv_p = 1.0 / p
    mean = jnp.sum(acc, axis=1, keepdims=True) * inv_p                          # (TC, 1)
    var = jnp.maximum(
        jnp.sum(acc * acc, axis=1, keepdims=True) * inv_p - mean * mean, 0.0)   # (TC, 1)
    scale = jax.lax.rsqrt(var + eps)
    shift = -mean * scale
    y = acc * scale + shift
    out_ref[...] = jnp.where(y >= 0, y, neg_slope * y).astype(out_ref.dtype)


def _space_to_depth_split(x, k4c, compute_dtype):
    """NCHW (B,C,H,W) -> (B, 2, OH+1, OW, k4c): space-to-depth of the zero-padded input,
    feature index = (ph*2+pw)*C + c, lane-padded to k4c, pre-split along the dw tap."""
    b, c, h, w = x.shape
    oh, ow = h // 2, w // 2
    xp = jnp.pad(x, ((0, 0), (0, 0), (1, 1), (1, 1)))
    xs = xp.reshape(b, c, oh + 1, 2, ow + 1, 2)              # (B, C, I, ph, J, pw)
    xs = jnp.transpose(xs, (0, 2, 4, 3, 5, 1))               # (B, I, J, ph, pw, C)
    xs = xs.reshape(b, oh + 1, ow + 1, 4 * c).astype(compute_dtype)
    if k4c > 4 * c:
        xs = jnp.pad(xs, ((0, 0), (0, 0), (0, 0), (0, k4c - 4 * c)))
    return jnp.stack([xs[:, :, :ow, :], xs[:, :, 1:, :]], axis=1)


def _pack_weight(w, k4c, compute_dtype):
    """(C_out, C_in, 4, 4) -> (C_out, 4*k4c); tap = 2*dh+dw, within-tap index
    (ph*2+pw)*C_in + ci, with kh = 2*dh+ph, kw = 2*dw+pw (matches _space_to_depth_split)."""
    c_out, c_in = w.shape[:2]
    wr = w.reshape(c_out, c_in, 2, 2, 2, 2)                  # (co, ci, dh, ph, dw, pw)
    wr = jnp.transpose(wr, (0, 2, 4, 3, 5, 1))               # (co, dh, dw, ph, pw, ci)
    wr = wr.reshape(c_out, 4, 4 * c_in).astype(compute_dtype)
    if k4c > 4 * c_in:
        wr = jnp.pad(wr, ((0, 0), (0, 0), (0, k4c - 4 * c_in)))
    return wr.reshape(c_out, 4 * k4c)


def unet_down(x, weight, *, eps=EPS, neg_slope=NEG_SLOPE,
              compute_dtype=jnp.bfloat16, channel_tile=128, out_dtype=None):
    """x: (B, C_in, H, W) NCHW; weight: (C_out, C_in, 4, 4). Returns NCHW (B, C_out, H/2, W/2)."""
    b, c_in, h, w = x.shape
    c_out = weight.shape[0]
    assert weight.shape == (c_out, c_in, 4, 4)
    assert h % 2 == 0 and w % 2 == 0, "UNetDown expects even spatial dims"
    oh, ow = h // 2, w // 2
    p = oh * ow
    k4 = 4 * c_in
    k4c = max(128, ((k4 + 127) // 128) * 128)        # lane-pad the per-tap contraction dim
    out_dtype = x.dtype if out_dtype is None else out_dtype

    xs = _space_to_depth_split(x, k4c, compute_dtype)   # (B, 2, OH+1, OW, K4c)
    wp = _pack_weight(weight, k4c, compute_dtype)       # (C_out, 4*K4c)

    # Channel tile: InstanceNorm stats are per-channel, so channel tiles are independent.
    # TODO(synk): prefer channel_tile=256 on v6e when c_out >= 256; smaller tiles (and a
    # spatially-tiled two-pass conv+stats / normalize scheme) for very large P on v7x.
    tc = channel_tile if c_out % channel_tile == 0 else c_out
    nc = c_out // tc

    # VMEM budget for vmem_limit_bytes (double-buffered blocks + scratch + acc headroom).
    cdt = jnp.dtype(compute_dtype).itemsize
    odt = jnp.dtype(out_dtype).itemsize
    bytes_xs = 2 * (oh + 1) * ow * k4c * cdt
    bytes_w = tc * 4 * k4c * cdt
    bytes_out = tc * p * odt
    bytes_scr = p * 4 * k4c * cdt
    bytes_acc = tc * p * 4
    need = 2 * bytes_xs + 2 * bytes_w + 2 * bytes_out + bytes_scr + 3 * bytes_acc
    vmem_limit = min(max(int(need * 1.4) + (4 << 20), 32 << 20), 120 << 20)

    # Grid order: keep the heavier operand resident across the inner grid axis.
    w_total_bytes = c_out * 4 * k4c * cdt
    weight_major = w_total_bytes * (b - 1) >= b * bytes_xs * (nc - 1)
    if weight_major:
        grid = (nc, b)
        xs_map = lambda ci, bi: (bi, 0, 0, 0, 0)
        w_map = lambda ci, bi: (ci, 0)
        out_map = lambda ci, bi: (bi, ci, 0)
    else:
        grid = (b, nc)
        xs_map = lambda bi, ci: (bi, 0, 0, 0, 0)
        w_map = lambda bi, ci: (ci, 0)
        out_map = lambda bi, ci: (bi, ci, 0)

    kernel = functools.partial(_unet_down_kernel, oh=oh, ow=ow,
                               eps=eps, neg_slope=neg_slope)

    out = pl.pallas_call(
        kernel,
        out_shape=jax.ShapeDtypeStruct((b, c_out, p), out_dtype),
        grid_spec=pltpu.PrefetchScalarGridSpec(
            num_scalar_prefetch=0,
            grid=grid,
            in_specs=[
                # Full per-batch spatial window (with 1-row halo), dw-pre-split.
                pl.BlockSpec((pl.Squeezed(), 2, oh + 1, ow, k4c), xs_map),
                # Packed weight tile, taps flattened into the contraction dim.
                pl.BlockSpec((tc, 4 * k4c), w_map),
            ],
            # (C_out_tile, OH*OW): already NCHW after a free reshape; spatial on lanes.
            out_specs=pl.BlockSpec((pl.Squeezed(), tc, p), out_map),
            scratch_shapes=[pltpu.VMEM((p, 4 * k4c), compute_dtype)],
        ),
        compiler_params=pltpu.CompilerParams(
            dimension_semantics=("parallel", "parallel"),
            vmem_limit_bytes=vmem_limit),
        cost_estimate=pl.CostEstimate(
            flops=2 * b * c_out * p * 16 * c_in,
            transcendentals=0,
            bytes_accessed=xs.size * cdt + wp.size * cdt + b * c_out * p * odt),
    )(xs, wp)

    return out.reshape(b, c_out, oh, ow)


def _reference(x, weight, eps=EPS, neg_slope=NEG_SLOPE):
    """Pure-JAX f32 reference matching the PyTorch module."""
    y = jax.lax.conv_general_dilated(
        x, weight, window_strides=(2, 2), padding=((1, 1), (1, 1)),
        dimension_numbers=("NCHW", "OIHW", "NCHW"),
        precision=jax.lax.Precision.HIGHEST)
    mean = jnp.mean(y, axis=(2, 3), keepdims=True)
    var = jnp.mean((y - mean) ** 2, axis=(2, 3), keepdims=True)
    y = (y - mean) * jax.lax.rsqrt(var + eps)
    return jnp.where(y >= 0, y, neg_slope * y)


if __name__ == "__main__":
    key = jax.random.PRNGKey(0)
    k_x, k_w = jax.random.split(key)

    B, C_in, H, W = 2, 4, 16, 16
    C_out = 8

    x = jax.random.normal(k_x, (B, C_in, H, W), dtype=jnp.float32)
    fan_in = C_in * 4 * 4
    bound = 1.0 / (fan_in ** 0.5)
    weight = jax.random.uniform(k_w, (C_out, C_in, 4, 4), dtype=jnp.float32,
                                minval=-bound, maxval=bound)

    y = jax.jit(unet_down)(x, weight)
    jax.block_until_ready(y)
    assert y.shape == (B, C_out, H // 2, W // 2)

    # Correctness vs. an f32 XLA reference (kernel uses bf16 operands -> loose tolerance).
    y_ref = _reference(x, weight)
    max_err = float(jnp.max(jnp.abs(y - y_ref)))
    assert max_err < 0.2, f"kernel/reference mismatch: max abs err = {max_err}"

    print("KERNEL_OK")
</pallas_src>

<mosaic_0001>
module attributes {stable_mosaic.version = 11 : i64} {
  func.func @_unet_down_kernel(%arg0: i32, %arg1: i32, %arg2: memref<1x2x9x8x128xbf16, #tpu.memory_space<vmem>>, %arg3: memref<8x512xbf16, #tpu.memory_space<vmem>>, %arg4: memref<1x8x64xf32, #tpu.memory_space<vmem>>, %arg5: memref<64x512xbf16, #tpu.memory_space<vmem>>) attributes {dimension_semantics = [#tpu.dimension_semantics<parallel>, #tpu.dimension_semantics<parallel>], iteration_bounds = array<i64: 1, 2>, scalar_prefetch = 0 : i64, scratch_operands = 1 : i64, tpu.core_type = #tpu.core_type<tc>, window_params = [{transform_indices = @transform_0, window_bounds = array<i64: 1, 2, 9, 8, 128>}, {transform_indices = @transform_1, window_bounds = array<i64: 8, 512>}, {transform_indices = @transform_2, window_bounds = array<i64: 1, 8, 64>}]} {
    %c0 = arith.constant 0 : index
    %c0_0 = arith.constant 0 : index
    %c0_1 = arith.constant 0 : index
    %c0_2 = arith.constant 0 : index
    %c0_3 = arith.constant 0 : index
    %0 = vector.load %arg2[%c0, %c0_0, %c0_1, %c0_2, %c0_3] : memref<1x2x9x8x128xbf16, #tpu.memory_space<vmem>>, vector<1x1x8x8x128xbf16>
    %1 = vector.shape_cast %0 : vector<1x1x8x8x128xbf16> to vector<8x8x128xbf16>
    %2 = vector.shape_cast %1 : vector<8x8x128xbf16> to vector<64x128xbf16>
    %c0_4 = arith.constant 0 : index
    %c0_5 = arith.constant 0 : index
    %3 = vector.load %arg5[%c0_4, %c0_5] : memref<64x512xbf16, #tpu.memory_space<vmem>>, vector<64x128xbf16>
    tpu.vector_store %arg5[%c0_4, %c0_5], %2 {strides = array<i32>} : memref<64x512xbf16, #tpu.memory_space<vmem>>, vector<64x128xbf16>,
    %c0_6 = arith.constant 0 : index
    %c1 = arith.constant 1 : index
    %c0_7 = arith.constant 0 : index
    %c0_8 = arith.constant 0 : index
    %c0_9 = arith.constant 0 : index
    %4 = vector.load %arg2[%c0_6, %c1, %c0_7, %c0_8, %c0_9] : memref<1x2x9x8x128xbf16, #tpu.memory_space<vmem>>, vector<1x1x8x8x128xbf16>
    %5 = vector.shape_cast %4 : vector<1x1x8x8x128xbf16> to vector<8x8x128xbf16>
    %6 = vector.shape_cast %5 : vector<8x8x128xbf16> to vector<64x128xbf16>
    %c0_10 = arith.constant 0 : index
    %c128 = arith.constant 128 : index
    %7 = vector.load %arg5[%c0_10, %c128] : memref<64x512xbf16, #tpu.memory_space<vmem>>, vector<64x128xbf16>
    tpu.vector_store %arg5[%c0_10, %c128], %6 {strides = array<i32>} : memref<64x512xbf16, #tpu.memory_space<vmem>>, vector<64x128xbf16>,
    %c0_11 = arith.constant 0 : index
    %c0_12 = arith.constant 0 : index
    %c1_13 = arith.constant 1 : index
    %c0_14 = arith.constant 0 : index
    %c0_15 = arith.constant 0 : index
    %8 = vector.load %arg2[%c0_11, %c0_12, %c1_13, %c0_14, %c0_15] : memref<1x2x9x8x128xbf16, #tpu.memory_space<vmem>>, vector<1x1x8x8x128xbf16>
    %9 = vector.shape_cast %8 : vector<1x1x8x8x128xbf16> to vector<8x8x128xbf16>
    %10 = vector.shape_cast %9 : vector<8x8x128xbf16> to vector<64x128xbf16>
    %c0_16 = arith.constant 0 : index
    %c256 = arith.constant 256 : index
    %11 = vector.load %arg5[%c0_16, %c256] : memref<64x512xbf16, #tpu.memory_space<vmem>>, vector<64x128xbf16>
    tpu.vector_store %arg5[%c0_16, %c256], %10 {strides = array<i32>} : memref<64x512xbf16, #tpu.memory_space<vmem>>, vector<64x128xbf16>,
    %c0_17 = arith.constant 0 : index
    %c1_18 = arith.constant 1 : index
    %c1_19 = arith.constant 1 : index
    %c0_20 = arith.constant 0 : index
    %c0_21 = arith.constant 0 : index
    %12 = vector.load %arg2[%c0_17, %c1_18, %c1_19, %c0_20, %c0_21] : memref<1x2x9x8x128xbf16, #tpu.memory_space<vmem>>, vector<1x1x8x8x128xbf16>
    %13 = vector.shape_cast %12 : vector<1x1x8x8x128xbf16> to vector<8x8x128xbf16>
    %14 = vector.shape_cast %13 : vector<8x8x128xbf16> to vector<64x128xbf16>
    %c0_22 = arith.constant 0 : index
    %c384 = arith.constant 384 : index
    %15 = vector.load %arg5[%c0_22, %c384] : memref<64x512xbf16, #tpu.memory_space<vmem>>, vector<64x128xbf16>
    tpu.vector_store %arg5[%c0_22, %c384], %14 {strides = array<i32>} : memref<64x512xbf16, #tpu.memory_space<vmem>>, vector<64x128xbf16>,
    %c0_23 = arith.constant 0 : index
    %c0_24 = arith.constant 0 : index
    %16 = vector.load %arg3[%c0_23, %c0_24] : memref<8x512xbf16, #tpu.memory_space<vmem>>, vector<8x512xbf16>
    %c0_25 = arith.constant 0 : index
    %c0_26 = arith.constant 0 : index
    %17 = vector.load %arg5[%c0_25, %c0_26] : memref<64x512xbf16, #tpu.memory_space<vmem>>, vector<64x512xbf16>
    %cst = arith.constant dense<0.000000e+00> : vector<8x64xf32>
    %18 = tpu.matmul %16, %17, %cst {dimension_numbers = #tpu.dot_dimension_numbers<[1], [1], [0], [0], [0, 0, 1, 0], [], []>} : vector<8x512xbf16>, vector<64x512xbf16>, vector<8x64xf32> -> vector<8x64xf32>
    %cst_27 = arith.constant dense<0.000000e+00> : vector<8xf32>
    %19 = vector.multi_reduction <add>, %18, %cst_27 [1] : vector<8x64xf32> to vector<8xf32>
    %20 = vector.shape_cast %19 : vector<8xf32> to vector<8x1xf32>
    %cst_28 = arith.constant 1.562500e-02 : f32
    %21 = vector.broadcast %cst_28 : f32 to vector<8x1xf32>
    %22 = arith.mulf %20, %21 : vector<8x1xf32>
    %23 = arith.mulf %18, %18 : vector<8x64xf32>
    %cst_29 = arith.constant dense<0.000000e+00> : vector<8xf32>
    %24 = vector.multi_reduction <add>, %23, %cst_29 [1] : vector<8x64xf32> to vector<8xf32>
    %25 = vector.shape_cast %24 : vector<8xf32> to vector<8x1xf32>
    %cst_30 = arith.constant 1.562500e-02 : f32
    %26 = vector.broadcast %cst_30 : f32 to vector<8x1xf32>
    %27 = arith.mulf %25, %26 : vector<8x1xf32>
    %28 = arith.mulf %22, %22 : vector<8x1xf32>
    %29 = arith.subf %27, %28 : vector<8x1xf32>
    %cst_31 = arith.constant 0.000000e+00 : f32
    %30 = vector.broadcast %cst_31 : f32 to vector<8x1xf32>
    %31 = arith.maximumf %29, %30 : vector<8x1xf32>
    %cst_32 = arith.constant 9.99999974E-6 : f32
    %32 = vector.broadcast %cst_32 : f32 to vector<8x1xf32>
    %33 = arith.addf %31, %32 : vector<8x1xf32>
    %34 = math.rsqrt %33 : vector<8x1xf32>
    %cst_33 = arith.constant 0.000000e+00 : f32
    %35 = vector.broadcast %cst_33 : f32 to vector<8x1xf32>
    %36 = arith.subf %35, %22 : vector<8x1xf32>
    %37 = arith.mulf %36, %34 : vector<8x1xf32>
    %38 = vector.broadcast %34 : vector<8x1xf32> to vector<8x64xf32>
    %39 = arith.mulf %18, %38 : vector<8x64xf32>
    %40 = vector.broadcast %37 : vector<8x1xf32> to vector<8x64xf32>
    %41 = arith.addf %39, %40 : vector<8x64xf32>
    %cst_34 = arith.constant 0.000000e+00 : f32
    %42 = vector.broadcast %cst_34 : f32 to vector<8x64xf32>
    %43 = arith.cmpf oge, %41, %42 : vector<8x64xf32>
    %cst_35 = arith.constant 2.000000e-01 : f32
    %44 = vector.broadcast %cst_35 : f32 to vector<8x64xf32>
    %45 = arith.mulf %44, %41 : vector<8x64xf32>
    %46 = arith.select %43, %41, %45 : vector<8x64xi1>, vector<8x64xf32>
    %c0_36 = arith.constant 0 : index
    %c0_37 = arith.constant 0 : index
    %c0_38 = arith.constant 0 : index
    %47 = vector.load %arg4[%c0_36, %c0_37, %c0_38] : memref<1x8x64xf32, #tpu.memory_space<vmem>>, vector<1x8x64xf32>
    %48 = vector.shape_cast %47 : vector<1x8x64xf32> to vector<8x64xf32>
    %49 = vector.shape_cast %46 : vector<8x64xf32> to vector<1x8x64xf32>
    tpu.vector_store %arg4[%c0_36, %c0_37, %c0_38], %49 {strides = array<i32>} : memref<1x8x64xf32, #tpu.memory_space<vmem>>, vector<1x8x64xf32>,
    return
  }
  func.func @transform_0(%arg0: i32, %arg1: i32) -> (i32, i32, i32, i32, i32) {
    %c0_i32 = arith.constant 0 : i32
    %c0_i32_0 = arith.constant 0 : i32
    %c0_i32_1 = arith.constant 0 : i32
    %c0_i32_2 = arith.constant 0 : i32
    %c0_i32_3 = arith.constant 0 : i32
    return %arg1, %c0_i32, %c0_i32_0, %c0_i32_1, %c0_i32_2 : i32, i32, i32, i32, i32
  }
  func.func @transform_1(%arg0: i32, %arg1: i32) -> (i32, i32) {
    %c0_i32 = arith.constant 0 : i32
    %c0_i32_0 = arith.constant 0 : i32
    return %arg0, %c0_i32 : i32, i32
  }
  func.func @transform_2(%arg0: i32, %arg1: i32) -> (i32, i32, i32) {
    %c0_i32 = arith.constant 0 : i32
    %c0_i32_0 = arith.constant 0 : i32
    return %arg1, %arg0, %c0_i32 : i32, i32, i32
  }
}

</mosaic_0001>

<llo_original>
// kernel: unet_down.1
$region0: #{unet_down.1}
  #allocation0 [shape = 'u32[]', space=smem, size = 0x4, offset = 0x4, fixed_abs, tag = 'smem constant byte address 0x4 - core index']
  #allocation1 [shape = 'u32[144,128]{1,0:T(1,128)}', space=vmem, size = 0x12000, scoped, tag = 'internal scratch']
  #allocation2 [shape = 'bf16[64,512]{1,0:T(16,128)(2,1)}', space=vmem, size = 0x10000, scoped, tag = 'scratch operand']
  %s0 = inlined_call_operand.vmem [shape: bf16[2,2,9,8,128], index: 0, kind: input, shape index: {}]
  %s1 = inlined_call_operand.vmem [shape: bf16[8,512], index: 1, kind: input, shape index: {}]
  %s2 = inlined_call_operand.vmem [shape: f32[2,8,64], index: 2, kind: output, shape index: {}]
  %s3 = sld [smem:[#allocation0]]
  $region41: #{unet_down.1} parent=0
    _
  %s5 = ssub.s32 1, %s3
  %s6 = scalar_select 0, %s5, %s3
  loop: start=0, step=1, limit=4
  $region2: #{unet_down.1} parent=0 // loop_pre_header
    _
  $region3: #{unet_down.1} parent=0 // loop_header
    %s8 = sphi 0, %s12
    %p9 = scmp.ge.s32.totalorder %s8, 4
    %s15 = sphi 0, %s27
    %s16 = sphi 0, %s23
    %s17 = sphi 0, %s15
    %s18 = sphi 0, %s16
    %s19 = sphi 0, %s17
    %s20 = sphi 0, %s18
    %s30 = sphi 0, %s32
    %s33 = sphi 0, %s30
    %s34 = sphi 0, %s33
    %s50 = sphi 0, %s34
    %s56 = sphi 0, %s58
    %s59 = sphi 0, %s56
    %s60 = sphi 0, %s59
    %s76 = sphi 0, %s60
    %s84 = sphi 0, %s86
    %s87 = sphi 0, %s84
    %s88 = sphi 0, %s87
    %s104 = sphi 0, %s88
  $region4: #{unet_down.1} parent=0 // loop_header_branch
    %11 = sbr.rel (%p9) target = $region8
  $region5: #{unet_down.1} parent=0 // loop_body
    %s13 = ssub.s32 %s8, 1
    %s14 = ssub.s32 %s8, 2
    %s21 = sadd.s32 1, %s16
    %p22 = scmp.ge.s32.totalorder %s21, 2
    %s23 = scalar_select %p22, 0, %s21
    %s24 = sadd.s32 1, %s15
    %s25 = scalar_select %p22, %s24, %s15
    %p26 = scmp.ge.s32.totalorder %s25, 1
    %s27 = scalar_select %p26, 0, %s25
    %s28 = ssub.s32 %s16, %s23
    %p29 = scmp.eq.s32.totalorder %s28, 0
    %s31 = sadd.s32 %s30, 1
    %s32 = scalar_select %p29, %s30, %s31
    %p35 = pneg %p29
    %p36 = scmp.eq.s32.totalorder %s8, 1
    %p37 = por %p35, %p36
    %p38 = scmp.ne.s32.totalorder %s30, %s33
    %p39 = scmp.eq.s32.totalorder %s8, 0
    %p40 = por %p38, %p39
    %p41 = scmp.ne.s32.totalorder %s30, %s33
    %p42 = scmp.eq.s32.totalorder %s13, 1
    %p43 = por %p41, %p42
    %p44 = scmp.ne.s32.totalorder %s33, %s34
    %p45 = scmp.eq.s32.totalorder %s13, 0
    %p46 = por %p44, %p45
    %p47 = scmp.ne.s32.totalorder %s33, %s34
    %p48 = scmp.eq.s32.totalorder %s14, 1
    %p49 = por %p47, %p48
    %p51 = scmp.ne.s32.totalorder %s34, %s50
    %p52 = scmp.eq.s32.totalorder %s14, 0
    %p53 = por %p51, %p52
    %s54 = ssub.s32 %s15, %s27
    %p55 = scmp.eq.s32.totalorder %s54, 0
    %s57 = sadd.s32 %s56, 1
    %s58 = scalar_select %p55, %s56, %s57
    %p61 = pneg %p55
    %p62 = scmp.eq.s32.totalorder %s8, 1
    %p63 = por %p61, %p62
    %p64 = scmp.ne.s32.totalorder %s56, %s59
    %p65 = scmp.eq.s32.totalorder %s8, 0
    %p66 = por %p64, %p65
    %p67 = scmp.ne.s32.totalorder %s56, %s59
    %p68 = scmp.eq.s32.totalorder %s13, 1
    %p69 = por %p67, %p68
    %p70 = scmp.ne.s32.totalorder %s59, %s60
    %p71 = scmp.eq.s32.totalorder %s13, 0
    %p72 = por %p70, %p71
    %p73 = scmp.ne.s32.totalorder %s59, %s60
    %p74 = scmp.eq.s32.totalorder %s14, 1
    %p75 = por %p73, %p74
    %p77 = scmp.ne.s32.totalorder %s60, %s76
    %p78 = scmp.eq.s32.totalorder %s14, 0
    %p79 = por %p77, %p78
    %s80 = ssub.s32 %s16, %s23
    %s81 = ssub.s32 %s15, %s27
    %s82 = sor.u32 %s80, %s81
    %p83 = scmp.eq.s32.totalorder %s82, 0
    %s85 = sadd.s32 %s84, 1
    %s86 = scalar_select %p83, %s84, %s85
    %p89 = pneg %p83
    %p90 = scmp.eq.s32.totalorder %s8, 1
    %p91 = por %p89, %p90
    %p92 = scmp.ne.s32.totalorder %s84, %s87
    %p93 = scmp.eq.s32.totalorder %s8, 0
    %p94 = por %p92, %p93
    %p95 = scmp.ne.s32.totalorder %s84, %s87
    %p96 = scmp.eq.s32.totalorder %s13, 1
    %p97 = por %p95, %p96
    %p98 = scmp.ne.s32.totalorder %s87, %s88
    %p99 = scmp.eq.s32.totalorder %s13, 0
    %p100 = por %p98, %p99
    %p101 = scmp.ne.s32.totalorder %s87, %s88
    %p102 = scmp.eq.s32.totalorder %s14, 1
    %p103 = por %p101, %p102
    %p105 = scmp.ne.s32.totalorder %s88, %s104
    %p106 = scmp.eq.s32.totalorder %s14, 0
    %p107 = por %p105, %p106
    %p108 = scmp.le.s32.totalorder 1, %s8
    %p109 = scmp.lt.s32.totalorder %s8, 3
    %p110 = pnand %p108, %p109
    %p111 = pneg %p110
    // Predicated region
    $region9: #{unet_down.1} parent=5 // pred_check
      _
    $region10: #{unet_down.1} parent=5 // pred_check_branch
      %113 = sbr.rel (%p110) target = $region12
    $region11: #{unet_down.1} parent=5 // pred_region
      %s114 = ssub.s32 %s8, 1
      // Predicated region
      $region13: #{unet_down.1} parent=11 // pred_check
        %p115 = pneg %p72
      $region14: #{unet_down.1} parent=11 // pred_check_branch
        %117 = sbr.rel (%p115) target = $region16
      $region15: #{unet_down.1} parent=11 // pred_region
        %p118 = scmp.lt.s32.totalorder %s17, 0
        %s119 = scalar_select %p118, %s17, 0
        %s120 = smul.addr %s119, 4
        %s121 = smul.addr %s120, 4
        %s122 = scalar_lea.vmem %s1, %s121
      $region16: #{unet_down.1} parent=11 // pred_fallthru
        _
    $region12: #{unet_down.1} parent=5 // pred_fallthru
      _
    %p123 = scmp.lt.s32.totalorder %s8, 2
    // Predicated region
    $region17: #{unet_down.1} parent=5 // pred_check
      %p124 = pneg %p123
    $region18: #{unet_down.1} parent=5 // pred_check_branch
      %126 = sbr.rel (%p124) target = $region20
    $region19: #{unet_down.1} parent=5 // pred_region
      // Predicated region
      $region21: #{unet_down.1} parent=19 // pred_check
        %p127 = pneg %p40
      $region22: #{unet_down.1} parent=19 // pred_check_branch
        %129 = sbr.rel (%p127) target = $region24
      $region23: #{unet_down.1} parent=19 // pred_region
        %p130 = scmp.lt.s32.totalorder %s16, 1
        %s131 = scalar_select %p130, %s16, 1
        %s132 = smul.addr %s131, 18
        %s133 = smul.addr %s132, 4
        %s134 = scalar_lea.vmem %s0, %s133
      $region24: #{unet_down.1} parent=19 // pred_fallthru
        _
    $region20: #{unet_down.1} parent=5 // pred_fallthru
      _
    %p135 = scmp.le.s32.totalorder 1, %s8
    %p136 = scmp.lt.s32.totalorder %s8, 3
    %p137 = pnand %p135, %p136
    %p138 = pneg %p137
    // Predicated region
    $region25: #{unet_down.1} parent=5 // pred_check
      _
    $region26: #{unet_down.1} parent=5 // pred_check_branch
      %140 = sbr.rel (%p137) target = $region28
    $region27: #{unet_down.1} parent=5 // pred_region
      %s141 = ssub.s32 %s8, 1
      %p142 = scmp.lt.s32.totalorder %s18, 1
      %s143 = scalar_select %p142, %s18, 1
      %s144 = smul.addr %s143, 18
      %s145 = smul.addr %s144, 4
      %s146 = scalar_lea.vmem %s0, %s145
      %p147 = pneg %p46
      %p148 = pneg %p43
      %p149 = scmp.lt.s32.totalorder %s17, 0
      %s150 = scalar_select %p149, %s17, 0
      %s151 = smul.addr %s150, 4
      %s152 = smul.addr %s151, 4
      %s153 = scalar_lea.vmem %s1, %s152
      %p154 = pneg %p72
      %p155 = pneg %p69
      %p156 = pneg %p100
      %p157 = pneg %p97
      %p158 = scmp.lt.s32.totalorder %s18, 1
      %s159 = scalar_select %p158, %s18, 1
      %p160 = scmp.lt.s32.totalorder %s17, 0
      %s161 = scalar_select %p160, %s17, 0
      %s162 = sadd.s32 %s161, %s159
      %s163 = smul.addr %s162, 8
      %s164 = scalar_lea.vmem %s2, %s163
      %p165 = scmp.lt.s32.totalorder %s18, 1
      %s166 = scalar_select %p165, %s18, 1
      %s167 = smul.addr %s166, 18
      %s168 = smul.addr %s167, 4
      %s169 = scalar_lea.vmem %s0, %s168
      %p170 = scmp.lt.s32.totalorder %s17, 0
      %s171 = scalar_select %p170, %s17, 0
      %s172 = smul.addr %s171, 4
      %s173 = smul.addr %s172, 4
      %s174 = scalar_lea.vmem %s1, %s173
      %p175 = scmp.lt.s32.totalorder %s18, 1
      %s176 = scalar_select %p175, %s18, 1
      %p177 = scmp.lt.s32.totalorder %s17, 0
      %s178 = scalar_select %p177, %s17, 0
      %s179 = sadd.s32 %s178, %s176
      %s180 = smul.addr %s179, 8
      %s181 = scalar_lea.vmem %s2, %s180
      %v183 = vld [vmem:[%s169] sm:$0xf]
      %v184 = vld [vmem:[%s169 + $0x4] sm:$0xf]
      %v185 = vld [vmem:[%s169 + $0x8] sm:$0xf]
      %v186 = vld [vmem:[%s169 + $0xc] sm:$0xf]
      %v187 = vld [vmem:[%s169 + $0x10] sm:$0xf]
      %v188 = vld [vmem:[%s169 + $0x14] sm:$0xf]
      %v189 = vld [vmem:[%s169 + $0x18] sm:$0xf]
      %v190 = vld [vmem:[%s169 + $0x1c] sm:$0xf]
      %v199 = vunpack.c.l.b16 %v183
      %v200 = vunpack.c.l.b16 %v184
      %v201 = vunpack.c.l.b16 %v185
      %v202 = vunpack.c.l.b16 %v186
      %v203 = vunpack.c.l.b16 %v187
      %v204 = vunpack.c.l.b16 %v188
      %v205 = vunpack.c.l.b16 %v189
      %v206 = vunpack.c.l.b16 %v190
      %v207 = vpack.c.b16 %v200, %v199
      %v208 = vpack.c.b16 %v202, %v201
      %v209 = vpack.c.b16 %v204, %v203
      %v210 = vpack.c.b16 %v206, %v205
      %215 = vst [vmem:[#allocation2] sm:$0xff] %v207
      %216 = vst [vmem:[#allocation2 + $0x20] sm:$0xff] %v208
      %217 = vst [vmem:[#allocation2 + $0x40] sm:$0xff] %v209
      %218 = vst [vmem:[#allocation2 + $0x60] sm:$0xff] %v210
      %s219 = scalar_lea.vmem %s169, 36
      %v220 = vld [vmem:[%s219] sm:$0xf]
      %v221 = vld [vmem:[%s219 + $0x4] sm:$0xf]
      %v222 = vld [vmem:[%s219 + $0x8] sm:$0xf]
      %v223 = vld [vmem:[%s219 + $0xc] sm:$0xf]
      %v224 = vld [vmem:[%s219 + $0x10] sm:$0xf]
      %v225 = vld [vmem:[%s219 + $0x14] sm:$0xf]
      %v226 = vld [vmem:[%s219 + $0x18] sm:$0xf]
      %v227 = vld [vmem:[%s219 + $0x1c] sm:$0xf]
      %v236 = vunpack.c.l.b16 %v220
      %v237 = vunpack.c.l.b16 %v221
      %v238 = vunpack.c.l.b16 %v222
      %v239 = vunpack.c.l.b16 %v223
      %v240 = vunpack.c.l.b16 %v224
      %v241 = vunpack.c.l.b16 %v225
      %v242 = vunpack.c.l.b16 %v226
      %v243 = vunpack.c.l.b16 %v227
      %v244 = vpack.c.b16 %v237, %v236
      %v245 = vpack.c.b16 %v239, %v238
      %v246 = vpack.c.b16 %v241, %v240
      %v247 = vpack.c.b16 %v243, %v242
      %252 = vst [vmem:[#allocation2 + $0x8] sm:$0xff] %v244
      %253 = vst [vmem:[#allocation2 + $0x28] sm:$0xff] %v245
      %254 = vst [vmem:[#allocation2 + $0x48] sm:$0xff] %v246
      %255 = vst [vmem:[#allocation2 + $0x68] sm:$0xff] %v247
      %s256 = scalar_lea.vmem %s169, 4
      %v257 = vld [vmem:[%s256] sm:$0xf]
      %v258 = vld [vmem:[%s256 + $0x4] sm:$0xf]
      %v259 = vld [vmem:[%s256 + $0x8] sm:$0xf]
      %v260 = vld [vmem:[%s256 + $0xc] sm:$0xf]
      %v261 = vld [vmem:[%s256 + $0x10] sm:$0xf]
      %v262 = vld [vmem:[%s256 + $0x14] sm:$0xf]
      %v263 = vld [vmem:[%s256 + $0x18] sm:$0xf]
      %v264 = vld [vmem:[%s256 + $0x1c] sm:$0xf]
      %v273 = vunpack.c.l.b16 %v257
      %v274 = vunpack.c.l.b16 %v258
      %v275 = vunpack.c.l.b16 %v259
      %v276 = vunpack.c.l.b16 %v260
      %v277 = vunpack.c.l.b16 %v261
      %v278 = vunpack.c.l.b16 %v262
      %v279 = vunpack.c.l.b16 %v263
      %v280 = vunpack.c.l.b16 %v264
      %v281 = vpack.c.b16 %v274, %v273
      %v282 = vpack.c.b16 %v276, %v275
      %v283 = vpack.c.b16 %v278, %v277
      %v284 = vpack.c.b16 %v280, %v279
      %289 = vst [vmem:[#allocation2 + $0x10] sm:$0xff] %v281
      %290 = vst [vmem:[#allocation2 + $0x30] sm:$0xff] %v282
      %291 = vst [vmem:[#allocation2 + $0x50] sm:$0xff] %v283
      %292 = vst [vmem:[#allocation2 + $0x70] sm:$0xff] %v284
      %s293 = scalar_lea.vmem %s169, 40
      %v294 = vld [vmem:[%s293] sm:$0xf]
      %v295 = vld [vmem:[%s293 + $0x4] sm:$0xf]
      %v296 = vld [vmem:[%s293 + $0x8] sm:$0xf]
      %v297 = vld [vmem:[%s293 + $0xc] sm:$0xf]
      %v298 = vld [vmem:[%s293 + $0x10] sm:$0xf]
      %v299 = vld [vmem:[%s293 + $0x14] sm:$0xf]
      %v300 = vld [vmem:[%s293 + $0x18] sm:$0xf]
      %v301 = vld [vmem:[%s293 + $0x1c] sm:$0xf]
      %v310 = vunpack.c.l.b16 %v294
      %v311 = vunpack.c.l.b16 %v295
      %v312 = vunpack.c.l.b16 %v296
      %v313 = vunpack.c.l.b16 %v297
      %v314 = vunpack.c.l.b16 %v298
      %v315 = vunpack.c.l.b16 %v299
      %v316 = vunpack.c.l.b16 %v300
      %v317 = vunpack.c.l.b16 %v301
      %v318 = vpack.c.b16 %v311, %v310
      %v319 = vpack.c.b16 %v313, %v312
      %v320 = vpack.c.b16 %v315, %v314
      %v321 = vpack.c.b16 %v317, %v316
      %326 = vst [vmem:[#allocation2 + $0x18] sm:$0xff] %v318
      %327 = vst [vmem:[#allocation2 + $0x38] sm:$0xff] %v319
      %328 = vst [vmem:[#allocation2 + $0x58] sm:$0xff] %v320
      %329 = vst [vmem:[#allocation2 + $0x78] sm:$0xff] %v321
      %v330 = vld [vmem:[%s174] sm:$0xff]
      %v331 = vld [vmem:[%s174 + $0x8] sm:$0xff]
      %v332 = vld [vmem:[#allocation2] sm:$0xff]
      %v333 = vld [vmem:[#allocation2 + $0x8] sm:$0xff]
      %v334 = vld [vmem:[#allocation2 + $0x10] sm:$0xff]
      %v335 = vld [vmem:[#allocation2 + $0x18] sm:$0xff]
      %v336 = vld [vmem:[#allocation2 + $0x20] sm:$0xff]
      %v337 = vld [vmem:[#allocation2 + $0x28] sm:$0xff]
      %v338 = vld [vmem:[#allocation2 + $0x30] sm:$0xff]
      %v339 = vld [vmem:[#allocation2 + $0x38] sm:$0xff]
      %v340 = vld [vmem:[#allocation2 + $0x40] sm:$0xff]
      %v341 = vld [vmem:[#allocation2 + $0x48] sm:$0xff]
      %v342 = vld [vmem:[#allocation2 + $0x50] sm:$0xff]
      %v343 = vld [vmem:[#allocation2 + $0x58] sm:$0xff]
      %v344 = vld [vmem:[#allocation2 + $0x60] sm:$0xff]
      %v345 = vld [vmem:[#allocation2 + $0x68] sm:$0xff]
      %v346 = vld [vmem:[#allocation2 + $0x70] sm:$0xff]
      %v347 = vld [vmem:[#allocation2 + $0x78] sm:$0xff]
      %v350 = vunpack.c.l.b16 %v330
      %v351 = vunpack.c.h.b16 %v330
      %v352 = vunpack.c.l.b16 %v331
      %v353 = vunpack.c.h.b16 %v331
      %v354 = vpack.c.b16 %v350, %v350
      %v355 = vpack.c.b16 %v351, %v351
      %v356 = vpack.c.b16 %v352, %v352
      %v357 = vpack.c.b16 %v353, %v353
      %362 = vmatprep.subr.bf16.mxu0 %v333
      %363 = vmatpush1.bf16.xpose.msra.mxu0 %v332
      %364 = vmatprep.subr.bf16.mxu0 %v337
      %365 = vmatpush1.bf16.xpose.msra.mxu0 %v336
      %366 = vmatprep.subr.bf16.mxu0 %v341
      %367 = vmatpush1.bf16.xpose.msra.mxu0 %v340
      %368 = vmatprep.subr.bf16.mxu0 %v345
      %369 = vmatpush1.bf16.xpose.msra.mxu0 %v344
      %370 = vmatprep.subr.bf16.mxu0 0
      %371 = vmatpush1.bf16.xpose.msra.mxu0 0
      %372 = vmatprep.subr.bf16.mxu0 0
      %373 = vmatpush1.bf16.xpose.msra.mxu0 0
      %374 = vmatprep.subr.bf16.mxu0 0
      %375 = vmatpush1.bf16.xpose.msra.mxu0 0
      %376 = vmatprep.subr.bf16.mxu0 0
      %377 = vmatpush1.bf16.xpose.msra.mxu0 0
      %378 = vmatprep.subr.bf16.mxu0 0
      %379 = vmatpush1.bf16.xpose.msra.mxu0 0
      %380 = vmatprep.subr.bf16.mxu0 0
      %381 = vmatpush1.bf16.xpose.msra.mxu0 0
      %382 = vmatprep.subr.bf16.mxu0 0
      %383 = vmatpush1.bf16.xpose.msra.mxu0 0
      %384 = vmatprep.subr.bf16.mxu0 0
      %385 = vmatpush1.bf16.xpose.msra.mxu0 0
      %386 = vmatprep.subr.bf16.mxu0 0
      %387 = vmatpush1.bf16.xpose.msra.mxu0 0
      %388 = vmatprep.subr.bf16.mxu0 0
      %389 = vmatpush1.bf16.xpose.msra.mxu0 0
      %390 = vmatprep.subr.bf16.mxu0 0
      %391 = vmatpush1.bf16.xpose.msra.mxu0 0
      %392 = vmatprep.subr.bf16.mxu0 0
      %393 = vmatpush1.bf16.xpose.msra.mxu0 0
      %394 = vmatprep.mubr.bf16.mxu0 %v355
      %395 = vmatmul.mubr.bf16.gmra.mrb[0].mxu0 %v354
      %v396 = vpop.f32.mrb[0].mxu0
      %v397 = vadd.f32 0.0, %v396
      %v398 = vpop.f32.mrb[0].mxu0
      %v399 = vpop.f32.mrb[0].mxu0
      %v400 = vpop.f32.mrb[0].mxu0
      %401 = vdwg.mxu0
      %402 = vmatprep.subr.bf16.mxu0 %v335
      %403 = vmatpush1.bf16.xpose.msra.mxu0 %v334
      %404 = vmatprep.subr.bf16.mxu0 %v339
      %405 = vmatpush1.bf16.xpose.msra.mxu0 %v338
      %406 = vmatprep.subr.bf16.mxu0 %v343
      %407 = vmatpush1.bf16.xpose.msra.mxu0 %v342
      %408 = vmatprep.subr.bf16.mxu0 %v347
      %409 = vmatpush1.bf16.xpose.msra.mxu0 %v346
      %410 = vmatprep.subr.bf16.mxu0 0
      %411 = vmatpush1.bf16.xpose.msra.mxu0 0
      %412 = vmatprep.subr.bf16.mxu0 0
      %413 = vmatpush1.bf16.xpose.msra.mxu0 0
      %414 = vmatprep.subr.bf16.mxu0 0
      %415 = vmatpush1.bf16.xpose.msra.mxu0 0
      %416 = vmatprep.subr.bf16.mxu0 0
      %417 = vmatpush1.bf16.xpose.msra.mxu0 0
      %418 = vmatprep.subr.bf16.mxu0 0
      %419 = vmatpush1.bf16.xpose.msra.mxu0 0
      %420 = vmatprep.subr.bf16.mxu0 0
      %421 = vmatpush1.bf16.xpose.msra.mxu0 0
      %422 = vmatprep.subr.bf16.mxu0 0
      %423 = vmatpush1.bf16.xpose.msra.mxu0 0
      %424 = vmatprep.subr.bf16.mxu0 0
      %425 = vmatpush1.bf16.xpose.msra.mxu0 0
      %426 = vmatprep.subr.bf16.mxu0 0
      %427 = vmatpush1.bf16.xpose.msra.mxu0 0
      %428 = vmatprep.subr.bf16.mxu0 0
      %429 = vmatpush1.bf16.xpose.msra.mxu0 0
      %430 = vmatprep.subr.bf16.mxu0 0
      %431 = vmatpush1.bf16.xpose.msra.mxu0 0
      %432 = vmatprep.subr.bf16.mxu0 0
      %433 = vmatpush1.bf16.xpose.msra.mxu0 0
      %434 = vmatprep.mubr.bf16.mxu0 %v357
      %435 = vmatmul.mubr.bf16.gmra.mrb[0].mxu0 %v356
      %v436 = vpop.f32.mrb[0].mxu0
      %v437 = vadd.f32 %v397, %v436
      %v438 = vpop.f32.mrb[0].mxu0
      %v439 = vpop.f32.mrb[0].mxu0
      %v440 = vpop.f32.mrb[0].mxu0
      %441 = vdwg.mxu0
      %vm442 = vcmask 523264
      %v443 = vsel %vm442, %v437, 0.0
      %444 = vadd.xlane.f32.xlu0 %v443
      %v445 = vpop.xlane.xlu0 %444
      %v446 = vmul.f32 %v445, 0.015625
      %v447 = vmul.f32 %v437, %v437
      %v448 = vsel %vm442, %v447, 0.0
      %449 = vadd.xlane.f32.xlu0 %v448
      %v450 = vpop.xlane.xlu0 %449
      %v451 = vmul.f32 %v450, 0.015625
      %v452 = vmul.f32 %v446, %v446
      %v453 = vsub.f32 %v451, %v452
      %v454 = vmax.f32 %v453, 0.0
      %v455 = vadd.f32 %v454, 1e-05
      %v456 = vrsqrt.pop %v455
      %v457 = vsub.f32 0.0, %v446
      %v458 = vmul.f32 %v457, %v456
      %v459 = vmul.f32 %v437, %v456
      %v460 = vadd.f32 %v459, %v458
      %vm461 = vcmp.ge.f32.partialorder %v460, 0.0
      %v462 = vmul.f32 %v460, 0.2
      %v463 = vsel %vm461, %v460, %v462
      %464 = vst.msk [vmem:[%s181] sm:$0xff] %vm442, %v463
      %p465 = scmp.lt.s32.totalorder %s18, 1
      %s466 = scalar_select %p465, %s18, 1
      %p467 = scmp.lt.s32.totalorder %s17, 0
      %s468 = scalar_select %p467, %s17, 0
      %s469 = sadd.s32 %s468, %s466
      %s470 = smul.addr %s469, 8
      %s471 = scalar_lea.vmem %s2, %s470
      // Predicated region
      $region29: #{unet_down.1} parent=27 // pred_check
        %p472 = pneg %p97
      $region30: #{unet_down.1} parent=27 // pred_check_branch
        %474 = sbr.rel (%p472) target = $region32
      $region31: #{unet_down.1} parent=27 // pred_region
        _
      $region32: #{unet_down.1} parent=27 // pred_fallthru
        _
    $region28: #{unet_down.1} parent=5 // pred_fallthru
      _
    %p475 = scmp.le.s32.totalorder 2, %s8
    // Predicated region
    $region33: #{unet_down.1} parent=5 // pred_check
      %p476 = pneg %p475
    $region34: #{unet_down.1} parent=5 // pred_check_branch
      %478 = sbr.rel (%p476) target = $region36
    $region35: #{unet_down.1} parent=5 // pred_region
      %s479 = ssub.s32 %s8, 2
      // Predicated region
      $region37: #{unet_down.1} parent=35 // pred_check
        %p480 = pneg %p103
      $region38: #{unet_down.1} parent=35 // pred_check_branch
        %482 = sbr.rel (%p480) target = $region40
      $region39: #{unet_down.1} parent=35 // pred_region
        %p483 = scmp.lt.s32.totalorder %s20, 1
        %s484 = scalar_select %p483, %s20, 1
        %p485 = scmp.lt.s32.totalorder %s19, 0
        %s486 = scalar_select %p485, %s19, 0
        %s487 = sadd.s32 %s486, %s484
        %s488 = smul.addr %s487, 8
        %s489 = scalar_lea.vmem %s2, %s488
      $region40: #{unet_down.1} parent=35 // pred_fallthru
        _
    $region36: #{unet_down.1} parent=5 // pred_fallthru
      _
  $region6: #{unet_down.1} parent=0 // loop_footer
    %s12 = sadd.s32 1, %s8
  $region7: #{unet_down.1} parent=0 // loop_footer_branch
    %7 = sbr.rel target = $region3
  $region8: #{unet_down.1} parent=0 // loop_exit
    _

</llo_original>
